<compile_context>
chip_gen: v7x
topology: tpu7x:2x2x1
jax: 0.10.0
libtpu: 0.0.40
codegen_flags: <defaults>
</compile_context>

<pallas_src>
import functools

import jax
import jax.numpy as jnp
from jax import lax
from jax.experimental import pallas as pl
from jax.experimental.pallas import tpu as pltpu


def cross_entropy_kernel(x_ref, xt_ref, wt_ref, out_ref, *, n_valid):
    """One (tn, C) row tile -> (num, den) partials in a (1, 8, 128) block."""
    tn = x_ref.shape[0]

    x = x_ref[...].astype(jnp.float32)                        # (TN, C) upcast in-kernel
    m = jnp.max(x, axis=-1, keepdims=True)                    # (TN, 1)
    denom = jnp.sum(jnp.exp(x - m), axis=-1, keepdims=True)   # (TN, 1)

    xt = xt_ref[...]                                          # (TN, 1) f32: x[n, y_n]
    wt = wt_ref[...]                                          # (TN, 1) f32: w[y_n]

    # softmax probability of the target class (never materialize full probs).
    picked_p = jnp.exp(xt - m) * pl.reciprocal(denom, approx=False)   # (TN, 1)

    # Mask ragged tail rows of the last grid block (their VMEM content is
    # undefined) by global row index; select so garbage NaN/Inf is discarded.
    row = pl.program_id(0) * tn + lax.broadcasted_iota(jnp.int32, (tn, 1), 0)
    valid = row < n_valid
    num = jnp.sum(jnp.where(valid, wt * picked_p, 0.0))   # partial sum w[y]*p[n,y]
    den = jnp.sum(jnp.where(valid, wt, 0.0))              # partial sum w[y]

    # Lane-dense partial writeback: lane 0 = num, lane 1 = den, rest zero.
    lane = lax.broadcasted_iota(jnp.int32, out_ref.shape, 2)
    out_ref[...] = jnp.where(lane == 0, num, jnp.where(lane == 1, den, 0.0))


@functools.lru_cache(maxsize=None)
def _vmem_capacity_bytes():
    try:
        return int(pltpu.get_tpu_info().vmem_capacity_bytes)
    except Exception:
        return 64 << 20   # conservative default: v7x per-TensorCore VMEM


def _pick_block_rows(n, c, itemsize, sub, vmem_capacity):
    """Largest row tile (multiple of `sub`) fitting ~half of this generation's
    VMEM, counting double-buffered input, f32 temporaries and aux inputs; also
    capped so the 1-D 'parallel' grid keeps >= 2 steps whenever N allows."""
    budget = min(vmem_capacity // 2, 64 << 20)
    per_row = (c * itemsize * 2        # native-dtype logits block, double-buffered
               + c * 4 * 2             # f32 upcast copy + exp temporary
               + 2 * 128 * 4 * 2)      # (tn,1) x_tgt / w_tgt, lane-padded, 2 bufs
    tn = budget // max(1, per_row)
    tn = max(sub, min(8192, tn))       # big tiles OK for small C (amortize step cost)
    if n > sub:                        # keep G >= 2 so v7x megacore split has work
        half = max(sub, (pl.cdiv(n, 2) // sub) * sub)
        tn = min(tn, half)
    tn = min(tn, pl.cdiv(n, sub) * sub)
    return max(sub, (tn // sub) * sub)


@functools.partial(jax.jit, static_argnames=("block_rows",))
def cross_entropy(output_probs, classification, token_weight, *, block_rows=None):
    """output_probs: (N, C) float (f32/bf16 kept in native dtype),
    classification: (N,) int, token_weight: (C,) float. Returns scalar f32."""
    N, C = output_probs.shape
    x = output_probs                                  # native dtype in HBM, no pad
    itemsize = jnp.dtype(x.dtype).itemsize
    sub = 8 if itemsize >= 4 else 32 // itemsize      # sublane packing granule

    capacity = _vmem_capacity_bytes()
    tn = int(block_rows) if block_rows is not None else _pick_block_rows(
        N, C, itemsize, sub, capacity)
    tn = max(sub, (tn // sub) * sub)
    G = pl.cdiv(N, tn)

    # O(N) gathers in the wrapper (cheap) so the kernel's (TN, C) region carries
    # no one-hot compare / cast / weight broadcast — only the softmax denominator.
    tgt = classification.astype(jnp.int32)
    w_tgt = token_weight.astype(jnp.float32)[tgt].reshape(N, 1)             # w[y_n]
    x_tgt = jnp.take_along_axis(x, tgt[:, None], axis=-1).astype(jnp.float32)  # x[n,y_n]

    # Scoped VMEM limit sized to the generation (v5e default 16 MiB is too small).
    vmem_limit = int(max(32 << 20, min(capacity - (4 << 20), 100 << 20)))

    partials = pl.pallas_call(
        functools.partial(cross_entropy_kernel, n_valid=N),
        out_shape=jax.ShapeDtypeStruct((G, 8, 128), jnp.float32),
        grid=(G,),
        in_specs=[
            pl.BlockSpec((tn, C), lambda i: (i, 0)),   # logits tile (native dtype)
            pl.BlockSpec((tn, 1), lambda i: (i, 0)),   # x[n, y_n] rides row pipeline
            pl.BlockSpec((tn, 1), lambda i: (i, 0)),   # w[y_n]    rides row pipeline
        ],
        out_specs=pl.BlockSpec((1, 8, 128), lambda i: (i, 0, 0)),
        compiler_params=pltpu.CompilerParams(
            dimension_semantics=("parallel",),         # megacore split on v7x
            vmem_limit_bytes=vmem_limit,
        ),
    )(x, x_tgt, w_tgt)

    num = jnp.sum(partials[:, 0, 0])
    den = jnp.sum(partials[:, 0, 1])
    # NOTE: den == 0 (all picked weights zero) yields NaN, same as torch nll_loss.
    return -num / den


def cross_entropy_ref(output_probs, classification, token_weight):
    """Pure-JAX reference matching torch softmax + nll_loss(weight=..., mean)."""
    p = jax.nn.softmax(output_probs.astype(jnp.float32), axis=-1)
    pw = token_weight[classification]
    pp = jnp.take_along_axis(p, classification[:, None], axis=-1)[:, 0]
    return -jnp.sum(pw * pp) / jnp.sum(pw)


if __name__ == "__main__":
    key = jax.random.PRNGKey(0)
    k1, k2, k3, k4, k5, k6, k7 = jax.random.split(key, 7)

    # Small shape consistent with the module: batch of 8 rows, 32 classes.
    N, C = 8, 32
    x = jax.random.normal(k1, (N, C), dtype=jnp.float32)
    y = jax.random.randint(k2, (N,), 0, C, dtype=jnp.int32)
    w = jax.random.uniform(k3, (C,), dtype=jnp.float32, minval=0.5, maxval=1.5)

    loss = jax.block_until_ready(cross_entropy(x, y, w))
    ref = cross_entropy_ref(x, y, w)
    assert jnp.allclose(loss, ref, rtol=1e-5, atol=1e-6), (loss, ref)

    # Unaligned N and C: exercises the pad-free ragged tail (in-kernel row mask),
    # the full-minor-dim (non-128-multiple) logits block, and a multi-step grid.
    N2, C2 = 520, 300
    x2 = jax.random.normal(k4, (N2, C2), dtype=jnp.float32)
    y2 = jax.random.randint(k5, (N2,), 0, C2, dtype=jnp.int32)
    w2 = jnp.ones((C2,), jnp.float32).at[::7].set(0.25)

    loss2 = jax.block_until_ready(cross_entropy(x2, y2, w2))
    ref2 = cross_entropy_ref(x2, y2, w2)
    assert jnp.allclose(loss2, ref2, rtol=1e-5, atol=1e-6), (loss2, ref2)

    # bf16 logits stay bf16 in HBM (halves bytes moved); f32 math in-kernel.
    N3, C3 = 256, 384
    x3 = jax.random.normal(k6, (N3, C3), dtype=jnp.float32).astype(jnp.bfloat16)
    y3 = jax.random.randint(k7, (N3,), 0, C3, dtype=jnp.int32)
    w3 = jnp.ones((C3,), jnp.float32)

    loss3 = jax.block_until_ready(cross_entropy(x3, y3, w3, block_rows=64))
    ref3 = cross_entropy_ref(x3, y3, w3)
    assert jnp.allclose(loss3, ref3, rtol=1e-5, atol=1e-6), (loss3, ref3)

    print("KERNEL_OK")
</pallas_src>

<mosaic_0001>
module attributes {stable_mosaic.version = 11 : i64} {
  func.func @cross_entropy_kernel(%arg0: i32, %arg1: memref<8x32xf32, #tpu.memory_space<vmem>>, %arg2: memref<8x1xf32, #tpu.memory_space<vmem>>, %arg3: memref<8x1xf32, #tpu.memory_space<vmem>>, %arg4: memref<1x8x128xf32, #tpu.memory_space<vmem>>) attributes {dimension_semantics = [#tpu.dimension_semantics<parallel>], iteration_bounds = array<i64: 1>, scalar_prefetch = 0 : i64, scratch_operands = 0 : i64, tpu.core_type = #tpu.core_type<tc>, window_params = [{transform_indices = @transform_0, window_bounds = array<i64: 8, 32>}, {transform_indices = @transform_1, window_bounds = array<i64: 8, 1>}, {transform_indices = @transform_2, window_bounds = array<i64: 8, 1>}, {transform_indices = @transform_3, window_bounds = array<i64: 1, 8, 128>}]} {
    %c0 = arith.constant 0 : index
    %c0_0 = arith.constant 0 : index
    %0 = vector.load %arg1[%c0, %c0_0] : memref<8x32xf32, #tpu.memory_space<vmem>>, vector<8x32xf32>
    %cst = arith.constant dense<0xFF800000> : vector<8xf32>
    %1 = vector.multi_reduction <maximumf>, %0, %cst [1] : vector<8x32xf32> to vector<8xf32>
    %2 = vector.shape_cast %1 : vector<8xf32> to vector<8x1xf32>
    %3 = vector.broadcast %2 : vector<8x1xf32> to vector<8x32xf32>
    %4 = arith.subf %0, %3 : vector<8x32xf32>
    %5 = math.exp %4 : vector<8x32xf32>
    %cst_1 = arith.constant dense<0.000000e+00> : vector<8xf32>
    %6 = vector.multi_reduction <add>, %5, %cst_1 [1] : vector<8x32xf32> to vector<8xf32>
    %7 = vector.shape_cast %6 : vector<8xf32> to vector<8x1xf32>
    %c0_2 = arith.constant 0 : index
    %c0_3 = arith.constant 0 : index
    %8 = vector.load %arg2[%c0_2, %c0_3] : memref<8x1xf32, #tpu.memory_space<vmem>>, vector<8x1xf32>
    %c0_4 = arith.constant 0 : index
    %c0_5 = arith.constant 0 : index
    %9 = vector.load %arg3[%c0_4, %c0_5] : memref<8x1xf32, #tpu.memory_space<vmem>>, vector<8x1xf32>
    %10 = arith.subf %8, %2 : vector<8x1xf32>
    %11 = math.exp %10 : vector<8x1xf32>
    %12 = tpu.reciprocal %7 : vector<8x1xf32> -> vector<8x1xf32>
    %13 = arith.mulf %11, %12 : vector<8x1xf32>
    %c8_i32 = arith.constant 8 : i32
    %14 = arith.muli %arg0, %c8_i32 : i32
    %15 = tpu.iota {dimensions = array<i32: 0>} : vector<8x1xi32>
    %16 = vector.broadcast %14 : i32 to vector<8x1xi32>
    %17 = arith.addi %16, %15 : vector<8x1xi32>
    %c8_i32_6 = arith.constant 8 : i32
    %18 = vector.broadcast %c8_i32_6 : i32 to vector<8x1xi32>
    %19 = arith.cmpi slt, %17, %18 : vector<8x1xi32>
    %20 = arith.mulf %9, %13 : vector<8x1xf32>
    %cst_7 = arith.constant 0.000000e+00 : f32
    %21 = vector.broadcast %cst_7 : f32 to vector<8x1xf32>
    %22 = arith.select %19, %20, %21 : vector<8x1xi1>, vector<8x1xf32>
    %23 = vector.shape_cast %22 : vector<8x1xf32> to vector<1x8x1xf32>
    %cst_8 = arith.constant dense<0.000000e+00> : vector<1xf32>
    %24 = vector.multi_reduction <add>, %23, %cst_8 [1, 2] : vector<1x8x1xf32> to vector<1xf32>
    %25 = vector.shape_cast %24 : vector<1xf32> to vector<1x1x1xf32>
    %26 = vector.extract %25[0, 0, 0] : f32 from vector<1x1x1xf32>
    %cst_9 = arith.constant 0.000000e+00 : f32
    %27 = vector.broadcast %cst_9 : f32 to vector<8x1xf32>
    %28 = arith.select %19, %9, %27 : vector<8x1xi1>, vector<8x1xf32>
    %29 = vector.shape_cast %28 : vector<8x1xf32> to vector<1x8x1xf32>
    %cst_10 = arith.constant dense<0.000000e+00> : vector<1xf32>
    %30 = vector.multi_reduction <add>, %29, %cst_10 [1, 2] : vector<1x8x1xf32> to vector<1xf32>
    %31 = vector.shape_cast %30 : vector<1xf32> to vector<1x1x1xf32>
    %32 = vector.extract %31[0, 0, 0] : f32 from vector<1x1x1xf32>
    %33 = tpu.iota {dimensions = array<i32: 2>} : vector<1x8x128xi32>
    %c0_i32 = arith.constant 0 : i32
    %34 = vector.broadcast %c0_i32 : i32 to vector<1x8x128xi32>
    %35 = arith.cmpi eq, %33, %34 : vector<1x8x128xi32>
    %c1_i32 = arith.constant 1 : i32
    %36 = vector.broadcast %c1_i32 : i32 to vector<1x8x128xi32>
    %37 = arith.cmpi eq, %33, %36 : vector<1x8x128xi32>
    %cst_11 = arith.constant 0.000000e+00 : f32
    %38 = vector.broadcast %32 : f32 to vector<1x8x128xf32>
    %39 = vector.broadcast %cst_11 : f32 to vector<1x8x128xf32>
    %40 = arith.select %37, %38, %39 : vector<1x8x128xi1>, vector<1x8x128xf32>
    %41 = vector.broadcast %26 : f32 to vector<1x8x128xf32>
    %42 = arith.select %35, %41, %40 : vector<1x8x128xi1>, vector<1x8x128xf32>
    %c0_12 = arith.constant 0 : index
    %c0_13 = arith.constant 0 : index
    %c0_14 = arith.constant 0 : index
    %43 = vector.load %arg4[%c0_12, %c0_13, %c0_14] : memref<1x8x128xf32, #tpu.memory_space<vmem>>, vector<1x8x128xf32>
    tpu.vector_store %arg4[%c0_12, %c0_13, %c0_14], %42 {strides = array<i32>} : memref<1x8x128xf32, #tpu.memory_space<vmem>>, vector<1x8x128xf32>,
    return
  }
  func.func @transform_0(%arg0: i32) -> (i32, i32) {
    %c0_i32 = arith.constant 0 : i32
    %c0_i32_0 = arith.constant 0 : i32
    return %arg0, %c0_i32 : i32, i32
  }
  func.func @transform_1(%arg0: i32) -> (i32, i32) {
    %c0_i32 = arith.constant 0 : i32
    %c0_i32_0 = arith.constant 0 : i32
    return %arg0, %c0_i32 : i32, i32
  }
  func.func @transform_2(%arg0: i32) -> (i32, i32) {
    %c0_i32 = arith.constant 0 : i32
    %c0_i32_0 = arith.constant 0 : i32
    return %arg0, %c0_i32 : i32, i32
  }
  func.func @transform_3(%arg0: i32) -> (i32, i32, i32) {
    %c0_i32 = arith.constant 0 : i32
    %c0_i32_0 = arith.constant 0 : i32
    %c0_i32_1 = arith.constant 0 : i32
    return %arg0, %c0_i32, %c0_i32_0 : i32, i32, i32
  }
}

</mosaic_0001>

<llo_original>
// kernel: cross_entropy.1
$region0: #{cross_entropy.1}
  #allocation0 [shape = 'u32[]', space=smem, size = 0x4, offset = 0x4, fixed_abs, tag = 'smem constant byte address 0x4 - core index']
  #allocation1 [shape = 'u32[144,128]{1,0:T(1,128)}', space=vmem, size = 0x12000, scoped, tag = 'internal scratch']
  %s0 = inlined_call_operand.vmem [shape: f32[8,32], index: 0, kind: input, shape index: {}]
  %s1 = inlined_call_operand.vmem [shape: f32[8,1], index: 1, kind: input, shape index: {}]
  %s2 = inlined_call_operand.vmem [shape: f32[8,1], index: 2, kind: input, shape index: {}]
  %s3 = inlined_call_operand.vmem [shape: f32[1,8,128], index: 3, kind: output, shape index: {}]
  %s4 = sld [smem:[#allocation0]]
  $region22: #{cross_entropy.1} parent=0
    _
  %s6 = ssub.s32 1, %s4
  %s7 = scalar_select 0, %s6, %s4
  // Predicated region
  $region2: #{cross_entropy.1} parent=0 // pred_check
    _
  $region3: #{cross_entropy.1} parent=0 // pred_check_branch
    %9 = sbr.rel (0) target = $region5
  $region4: #{cross_entropy.1} parent=0 // pred_region
    _
  $region5: #{cross_entropy.1} parent=0 // pred_fallthru
    _
  // Predicated region
  $region6: #{cross_entropy.1} parent=0 // pred_check
    _
  $region7: #{cross_entropy.1} parent=0 // pred_check_branch
    %11 = sbr.rel (0) target = $region9
  $region8: #{cross_entropy.1} parent=0 // pred_region
    _
  $region9: #{cross_entropy.1} parent=0 // pred_fallthru
    _
  // Predicated region
  $region10: #{cross_entropy.1} parent=0 // pred_check
    _
  $region11: #{cross_entropy.1} parent=0 // pred_check_branch
    %13 = sbr.rel (0) target = $region13
  $region12: #{cross_entropy.1} parent=0 // pred_region
    _
  $region13: #{cross_entropy.1} parent=0 // pred_fallthru
    _
  %v14 = vld [vmem:[%s0] sm:$0xff]
  %vm15 = vcmask 261120
  %v16 = vsel %vm15, %v14, -inf
  %17 = vmax.xlane.f32.xlu0 %v16
  %v18 = vpop.xlane.xlu0 %17
  %v19 = vsub.f32 %v14, %v18
  %v20 = vmul.f32 %v19, 1.442695
  %v21 = vpow.pop %v20
  %v22 = vsel %vm15, %v21, 0.0
  %23 = vadd.xlane.f32.xlu0 %v22
  %v24 = vpop.xlane.xlu0 %23
  %v25 = vld [vmem:[%s1] sm:$0xff]
  %v26 = vld [vmem:[%s2] sm:$0xff]
  %v27 = vsub.f32 %v25, %v18
  %v28 = vmul.f32 %v27, 1.442695
  %v29 = vpow.pop %v28
  %v30 = vrcp.pop %v24
  %v31 = vmul.f32 %v29, %v30
  %s32 = smul.u32 0, 8
  %v33 = vlaneseq
  %v34 = vshrl.u32 %v33, 7
  %v35 = vstv %s32
  %v36 = vadd.s32 %v35, %v34
  %vm37 = vcmp.lt.s32.totalorder %v36, 8
  %v38 = vmul.f32 %v26, %v31
  %v39 = vsel %vm37, %v38, 0.0
  %vm40 = vcmask 7168
  %v41 = vsel %vm40, %v39, 0.0
  %42 = vadd.xlane.f32.xlu0 %v41
  %v43 = vpop.xlane.xlu0 %42
  %v44 = vrot.slane %v43, 4
  %v45 = vadd.f32 %v43, %v44
  %v46 = vrot.slane %v45, 2
  %v47 = vadd.f32 %v45, %v46
  %v48 = vrot.slane %v47, 1
  %v49 = vadd.f32 %v47, %v48
  %s50 = vtos %v49
  %v51 = vsel %vm37, %v26, 0.0
  %v52 = vsel %vm40, %v51, 0.0
  %53 = vadd.xlane.f32.xlu0 %v52
  %v54 = vpop.xlane.xlu0 %53
  %v55 = vrot.slane %v54, 4
  %v56 = vadd.f32 %v54, %v55
  %v57 = vrot.slane %v56, 2
  %v58 = vadd.f32 %v56, %v57
  %v59 = vrot.slane %v58, 1
  %v60 = vadd.f32 %v58, %v59
  %s61 = vtos %v60
  %v62 = vlaneseq
  %v63 = vand.u32 %v62, 127
  %vm64 = vcmp.eq.s32.totalorder %v63, 0
  %vm65 = vcmp.eq.s32.totalorder %v63, 1
  %v66 = vstv %s61
  %v67 = vsel %vm65, %v66, 0.0
  %v68 = vstv %s50
  %v69 = vsel %vm64, %v68, %v67
  %70 = vst [vmem:[%s3] sm:$0xff] %v69
  // Predicated region
  $region14: #{cross_entropy.1} parent=0 // pred_check
    _
  $region15: #{cross_entropy.1} parent=0 // pred_check_branch
    %72 = sbr.rel (0) target = $region17
  $region16: #{cross_entropy.1} parent=0 // pred_region
    _
  $region17: #{cross_entropy.1} parent=0 // pred_fallthru
    _
  // Predicated region
  $region18: #{cross_entropy.1} parent=0 // pred_check
    _
  $region19: #{cross_entropy.1} parent=0 // pred_check_branch
    %74 = sbr.rel (0) target = $region21
  $region20: #{cross_entropy.1} parent=0 // pred_region
    _
  $region21: #{cross_entropy.1} parent=0 // pred_fallthru
    _

</llo_original>
